<compile_context>
chip_gen: v6e
topology: v6e:2x2x1
jax: 0.10.0
libtpu: 0.0.40
codegen_flags: <defaults>
</compile_context>

<pallas_src>
import jax
import jax.numpy as jnp
from jax.experimental import pallas as pl
from jax.experimental.pallas import tpu as pltpu


def attention_kernel(x_ref, w_ref, u_ref, o_ref):
    # x_ref: (Bb, T, H) block of batch rows          (f32)
    # w_ref: (H, H) full weight                      (bf16)
    # u_ref: (H, 1) full weight                      (bf16)
    # o_ref: (Bb, H) output block                    (f32)
    Bb, T, H = x_ref.shape
    x = x_ref[...]                                   # (Bb, T, H) f32

    # Fold the batched block into a single (Bb*T, H) slab so one MXU matmul
    # covers every batch row of the step (M = Bb*T instead of T).
    x2 = x.reshape(Bb * T, H)

    # u = tanh(x @ W): bf16 MXU inputs, f32 accumulate. tanh stays in f32 so it
    # lowers/runs well on every generation (v5e has no bf16 EUP/VPU).
    u = jnp.tanh(
        jnp.dot(x2.astype(jnp.bfloat16), w_ref[...],
                preferred_element_type=jnp.float32))            # (Bb*T, H) f32

    # similarity = u @ u_omega (second MXU matmul, bf16 in / f32 out).
    sim = jnp.dot(u.astype(jnp.bfloat16), u_ref[...],
                  preferred_element_type=jnp.float32)           # (Bb*T, 1) f32
    sim = sim.reshape(Bb, T, 1)                                 # per-row scores

    # Numerically stable softmax over the time axis (dim=1), f32 throughout;
    # the denominator reciprocal goes to the EUP slot (approx=True).
    sim = sim - jnp.max(sim, axis=1, keepdims=True)
    e = jnp.exp(sim)
    att = e * pl.reciprocal(jnp.sum(e, axis=1, keepdims=True), approx=True)

    # Attention-weighted sum over time. Kept as a VPU multiply + sublane reduce:
    # at small T the batched (1,T)x(T,H) MXU alternative saves nothing and the
    # elementwise form lowers robustly for any Bb/T.
    o_ref[...] = jnp.sum(x * att, axis=1).astype(o_ref.dtype)


def attention_block_pallas(inputs, w_omega, u_omega, block_b=None):
    B, T, H = inputs.shape
    if block_b is None:
        # Target ~512 rows in the fused matmul M-dim (block_b * T) so each grid
        # step feeds the MXU a reasonably tall slab and the ~0.35us/step
        # pipeline overhead is amortized; cap so the double-buffered f32 x
        # block stays well inside the scoped-VMEM default on every chip gen.
        block_b = max(1, 512 // max(T, 1))
        vmem_cap_rows = max(1, (8 << 20) // max(T * H * 4 * 2, 1))
        block_b = min(block_b, vmem_cap_rows, B)
    # Sublane-align the batch block (multiple of 8) so the (block_b, H) output
    # block conforms to the (8, 128) tiling rule and stores stay unmasked along
    # sublanes even when the grid has more than one step.
    block_b = max(8, ((block_b + 7) // 8) * 8)
    grid_b = pl.cdiv(B, block_b)
    b_pad = grid_b * block_b

    x = inputs.astype(jnp.float32)
    if b_pad != B:
        # Zero-pad the batch so blocks divide evenly; padded rows produce a
        # harmless uniform softmax over zeros and are sliced away below.
        x = jnp.pad(x, ((0, b_pad - B), (0, 0), (0, 0)))

    # bf16 weights: halves W's DMA/VMEM footprint and feeds the MXU at bf16
    # rate. Their index_map is grid-invariant, so they stay resident in VMEM
    # across every grid step.
    w_bf = w_omega.astype(jnp.bfloat16)
    u_bf = u_omega.astype(jnp.bfloat16)

    out = pl.pallas_call(
        attention_kernel,
        out_shape=jax.ShapeDtypeStruct((b_pad, H), jnp.float32),
        grid_spec=pltpu.PrefetchScalarGridSpec(
            num_scalar_prefetch=0,
            grid=(grid_b,),
            in_specs=[
                pl.BlockSpec((block_b, T, H), lambda b: (b, 0, 0)),
                pl.BlockSpec((H, H), lambda b: (0, 0)),
                pl.BlockSpec((H, 1), lambda b: (0, 0)),
            ],
            out_specs=pl.BlockSpec((block_b, H), lambda b: (b, 0)),
        ),
        compiler_params=pltpu.CompilerParams(
            dimension_semantics=("parallel",),
        ),
    )(x, w_bf, u_bf)
    return out[:B]


def attention_block_ref(inputs, w_omega, u_omega):
    u = jnp.tanh(jnp.matmul(inputs, w_omega))
    sim = jnp.matmul(u, u_omega)                     # (B, T, 1)
    att = jax.nn.softmax(sim, axis=1)
    return jnp.sum(inputs * att, axis=1)             # (B, H)


if __name__ == "__main__":
    key = jax.random.PRNGKey(0)
    B, T, H = 8, 8, 32

    k_x, k_w, k_u = jax.random.split(key, 3)
    # Deterministic parameter init mirroring nn.init.uniform_(-0.1, 0.1)
    w_omega = jax.random.uniform(k_w, (H, H), jnp.float32, -0.1, 0.1)
    u_omega = jax.random.uniform(k_u, (H, 1), jnp.float32, -0.1, 0.1)
    x = jax.random.normal(k_x, (B, T, H), jnp.float32)

    out = attention_block_pallas(x, w_omega, u_omega)
    out = jax.block_until_ready(out)

    ref = attention_block_ref(x, w_omega, u_omega)
    assert out.shape == (B, H)
    # bf16 MXU products with f32 accumulation -> ~1e-3 abs error expected.
    assert jnp.allclose(out, ref, atol=1e-2, rtol=1e-2), "mismatch vs reference"

    print("KERNEL_OK")
</pallas_src>

<mosaic_0001>
module attributes {stable_mosaic.version = 11 : i64} {
  func.func @attention_kernel(%arg0: i32, %arg1: memref<8x8x32xf32, #tpu.memory_space<vmem>>, %arg2: memref<32x32xbf16, #tpu.memory_space<vmem>>, %arg3: memref<32x1xbf16, #tpu.memory_space<vmem>>, %arg4: memref<8x32xf32, #tpu.memory_space<vmem>>) attributes {dimension_semantics = [#tpu.dimension_semantics<parallel>], iteration_bounds = array<i64: 1>, scalar_prefetch = 0 : i64, scratch_operands = 0 : i64, tpu.core_type = #tpu.core_type<tc>, window_params = [{transform_indices = @transform_0, window_bounds = array<i64: 8, 8, 32>}, {pipeline_mode = #tpu.pipeline_mode<synchronous>, transform_indices = @transform_1, window_bounds = array<i64: 32, 32>}, {pipeline_mode = #tpu.pipeline_mode<synchronous>, transform_indices = @transform_2, window_bounds = array<i64: 32, 1>}, {transform_indices = @transform_3, window_bounds = array<i64: 8, 32>}]} {
    %c0 = arith.constant 0 : index
    %c0_0 = arith.constant 0 : index
    %c0_1 = arith.constant 0 : index
    %0 = vector.load %arg1[%c0, %c0_0, %c0_1] : memref<8x8x32xf32, #tpu.memory_space<vmem>>, vector<8x8x32xf32>
    %1 = vector.shape_cast %0 : vector<8x8x32xf32> to vector<64x32xf32>
    %2 = arith.truncf %1 : vector<64x32xf32> to vector<64x32xbf16>
    %c0_2 = arith.constant 0 : index
    %c0_3 = arith.constant 0 : index
    %3 = vector.load %arg2[%c0_2, %c0_3] : memref<32x32xbf16, #tpu.memory_space<vmem>>, vector<32x32xbf16>
    %cst = arith.constant dense<0.000000e+00> : vector<64x32xf32>
    %4 = tpu.matmul %2, %3, %cst {dimension_numbers = #tpu.dot_dimension_numbers<[1], [0], [0], [1], [0, 0, 1, 1], [], []>} : vector<64x32xbf16>, vector<32x32xbf16>, vector<64x32xf32> -> vector<64x32xf32>
    %5 = math.tanh %4 : vector<64x32xf32>
    %6 = arith.truncf %5 : vector<64x32xf32> to vector<64x32xbf16>
    %c0_4 = arith.constant 0 : index
    %c0_5 = arith.constant 0 : index
    %7 = vector.load %arg3[%c0_4, %c0_5] : memref<32x1xbf16, #tpu.memory_space<vmem>>, vector<32x1xbf16>
    %cst_6 = arith.constant dense<0.000000e+00> : vector<64x1xf32>
    %8 = tpu.matmul %6, %7, %cst_6 {dimension_numbers = #tpu.dot_dimension_numbers<[1], [0], [0], [1], [0, 0, 1, 1], [], []>} : vector<64x32xbf16>, vector<32x1xbf16>, vector<64x1xf32> -> vector<64x1xf32>
    %9 = vector.shape_cast %8 : vector<64x1xf32> to vector<8x8x1xf32>
    %cst_7 = arith.constant dense<0xFF800000> : vector<8x1xf32>
    %10 = vector.multi_reduction <maximumf>, %9, %cst_7 [1] : vector<8x8x1xf32> to vector<8x1xf32>
    %11 = vector.shape_cast %10 : vector<8x1xf32> to vector<8x1x1xf32>
    %12 = vector.broadcast %11 : vector<8x1x1xf32> to vector<8x8x1xf32>
    %13 = arith.subf %9, %12 : vector<8x8x1xf32>
    %14 = math.exp %13 : vector<8x8x1xf32>
    %cst_8 = arith.constant dense<0.000000e+00> : vector<8x1xf32>
    %15 = vector.multi_reduction <add>, %14, %cst_8 [1] : vector<8x8x1xf32> to vector<8x1xf32>
    %16 = vector.shape_cast %15 : vector<8x1xf32> to vector<8x1x1xf32>
    %17 = tpu.reciprocal %16 {approx = true} : vector<8x1x1xf32> -> vector<8x1x1xf32>
    %18 = vector.broadcast %17 : vector<8x1x1xf32> to vector<8x8x1xf32>
    %19 = arith.mulf %14, %18 : vector<8x8x1xf32>
    %20 = vector.broadcast %19 : vector<8x8x1xf32> to vector<8x8x32xf32>
    %21 = arith.mulf %0, %20 : vector<8x8x32xf32>
    %cst_9 = arith.constant dense<0.000000e+00> : vector<8x32xf32>
    %22 = vector.multi_reduction <add>, %21, %cst_9 [1] : vector<8x8x32xf32> to vector<8x32xf32>
    %c0_10 = arith.constant 0 : index
    %c0_11 = arith.constant 0 : index
    %23 = vector.load %arg4[%c0_10, %c0_11] : memref<8x32xf32, #tpu.memory_space<vmem>>, vector<8x32xf32>
    tpu.vector_store %arg4[%c0_10, %c0_11], %22 {strides = array<i32>} : memref<8x32xf32, #tpu.memory_space<vmem>>, vector<8x32xf32>,
    return
  }
  func.func @transform_0(%arg0: i32) -> (i32, i32, i32) {
    %c0_i32 = arith.constant 0 : i32
    %c0_i32_0 = arith.constant 0 : i32
    %c0_i32_1 = arith.constant 0 : i32
    return %arg0, %c0_i32, %c0_i32_0 : i32, i32, i32
  }
  func.func @transform_1(%arg0: i32) -> (i32, i32) {
    %c0_i32 = arith.constant 0 : i32
    %c0_i32_0 = arith.constant 0 : i32
    %c0_i32_1 = arith.constant 0 : i32
    return %c0_i32, %c0_i32_0 : i32, i32
  }
  func.func @transform_2(%arg0: i32) -> (i32, i32) {
    %c0_i32 = arith.constant 0 : i32
    %c0_i32_0 = arith.constant 0 : i32
    %c0_i32_1 = arith.constant 0 : i32
    return %c0_i32, %c0_i32_0 : i32, i32
  }
  func.func @transform_3(%arg0: i32) -> (i32, i32) {
    %c0_i32 = arith.constant 0 : i32
    %c0_i32_0 = arith.constant 0 : i32
    return %arg0, %c0_i32 : i32, i32
  }
}

</mosaic_0001>

<llo_original>
// kernel: tpu_custom_call.1
$region0: #{tpu_custom_call.1}
  #allocation0 [shape = 'u32[]', space=smem, size = 0x4, offset = 0x4, fixed_abs, tag = 'smem constant byte address 0x4 - core index']
  #allocation1 [shape = 'u32[144,128]{1,0:T(1,128)}', space=vmem, size = 0x12000, scoped, tag = 'internal scratch']
  %s0 = inlined_call_operand.hbm [shape: f32[8,8,32], index: 0, kind: input, shape index: {}]
  %s1 = inlined_call_operand.vmem [shape: bf16[32,32], index: 1, kind: input, shape index: {}]
  %s2 = inlined_call_operand.vmem [shape: bf16[32,1], index: 2, kind: input, shape index: {}]
  %s3 = inlined_call_operand.hbm [shape: f32[8,32], index: 3, kind: output, shape index: {}]
  %s4 = sld [smem:[#allocation0]]
  $region26: #{tpu_custom_call.1} parent=0
    _
  %s6 = ssub.s32 1, %s4
  %s7 = scalar_select 0, %s6, %s4
  $region1: #{tpu_custom_call.1} parent=0
    #allocation2 [shape = 'u8[32768]{0}', space=vmem, size = 0x8000, scoped, tag = 'input window, operand 0, single buffered']
    #allocation3 [shape = 's32[1]{0}', space=sflag, size = 0x4, scoped, tag = 'scoped memory for tpu_custom_call.1']
    #allocation4 [shape = 's32[1]{0}', space=sflag, size = 0x4, scoped, tag = 'scoped memory for tpu_custom_call.1']
    #allocation5 [shape = 'u8[4096]{0}', space=vmem, size = 0x1000, scoped, tag = 'output window, operand 0, single buffered']
    %8 = vsyncpa [#allocation3], 0
    %9 = vsyncpa [#allocation4], 0
    // Predicated region
    $region2: #{tpu_custom_call.1} parent=1 // pred_check
      _
    $region3: #{tpu_custom_call.1} parent=1 // pred_check_branch
      %11 = sbr.rel (0) target = $region5
    $region4: #{tpu_custom_call.1} parent=1 // pred_region
      %s13 = ssub.s32 1024, 1024
      %14 = vsyncadd [#allocation3], %s13
      %s15 = sshll.u32 [#allocation2], 4
      %s16 = int_to_ptr.vmem [resolvable:$true] %s15
      %21 = dma.hbm_to_vmem [thread:$0]  %s0, 1024, %s16, [#allocation3], 128, 128, 8
    $region5: #{tpu_custom_call.1} parent=1 // pred_fallthru
      _
    // Predicated region
    $region6: #{tpu_custom_call.1} parent=1 // pred_check
      _
    $region7: #{tpu_custom_call.1} parent=1 // pred_check_branch
      %23 = sbr.rel (0) target = $region9
    $region8: #{tpu_custom_call.1} parent=1 // pred_region
      _
    $region9: #{tpu_custom_call.1} parent=1 // pred_fallthru
      _
    // Predicated region
    $region10: #{tpu_custom_call.1} parent=1 // pred_check
      _
    $region11: #{tpu_custom_call.1} parent=1 // pred_check_branch
      %25 = sbr.rel (0) target = $region13
    $region12: #{tpu_custom_call.1} parent=1 // pred_region
      _
    $region13: #{tpu_custom_call.1} parent=1 // pred_fallthru
      _
    // Predicated region
    $region14: #{tpu_custom_call.1} parent=1 // pred_check
      _
    $region15: #{tpu_custom_call.1} parent=1 // pred_check_branch
      %27 = sbr.rel (0) target = $region17
    $region16: #{tpu_custom_call.1} parent=1 // pred_region
      %28 = dma.done [#allocation3], 1024
    $region17: #{tpu_custom_call.1} parent=1 // pred_fallthru
      _
    %v30 = vld [vmem:[#allocation2] sm:$0xff]
    %v31 = vld [vmem:[#allocation2 + $0x8] sm:$0xff]
    %v32 = vld [vmem:[#allocation2 + $0x10] sm:$0xff]
    %v33 = vld [vmem:[#allocation2 + $0x18] sm:$0xff]
    %v34 = vld [vmem:[#allocation2 + $0x20] sm:$0xff]
    %v35 = vld [vmem:[#allocation2 + $0x28] sm:$0xff]
    %v36 = vld [vmem:[#allocation2 + $0x30] sm:$0xff]
    %v37 = vld [vmem:[#allocation2 + $0x38] sm:$0xff]
    %v38 = vpack.c.bf16 %v31, %v30
    %v39 = vpack.c.bf16 %v33, %v32
    %v40 = vpack.c.bf16 %v35, %v34
    %v41 = vpack.c.bf16 %v37, %v36
    %v42 = vld [vmem:[%s1] sm:$0xf]
    %v43 = vld [vmem:[%s1 + $0x4] sm:$0xf]
    %v44 = vld [vmem:[%s1 + $0x8] sm:$0xf]
    %v45 = vld [vmem:[%s1 + $0xc] sm:$0xf]
    %v50 = vunpack.c.l.b16 %v42
    %v51 = vunpack.c.l.b16 %v43
    %v52 = vunpack.c.l.b16 %v44
    %v53 = vunpack.c.l.b16 %v45
    %v54 = vpack.c.b16 %v51, %v50
    %v55 = vpack.c.b16 %v53, %v52
    %vm58 = vcmask 261120
    %v60 = vsel %vm58, %v38, 0
    %v63 = vsel %vm58, %v39, 0
    %v66 = vsel %vm58, %v40, 0
    %v69 = vsel %vm58, %v41, 0
    %71 = vmatprep.subr.bf16.mxu0 0
    %72 = vmatpush1.bf16.msra.mxu0 0
    %73 = vmatprep.subr.bf16.mxu0 0
    %74 = vmatpush1.bf16.msra.mxu0 0
    %75 = vmatprep.subr.bf16.mxu0 0
    %76 = vmatpush1.bf16.msra.mxu0 0
    %77 = vmatprep.subr.bf16.mxu0 0
    %78 = vmatpush1.bf16.msra.mxu0 0
    %79 = vmatprep.subr.bf16.mxu0 0
    %80 = vmatpush1.bf16.msra.mxu0 0
    %81 = vmatprep.subr.bf16.mxu0 0
    %82 = vmatpush1.bf16.msra.mxu0 0
    %83 = vmatprep.subr.bf16.mxu0 0
    %84 = vmatpush1.bf16.msra.mxu0 %v55
    %85 = vmatprep.subr.bf16.mxu0 0
    %86 = vmatpush1.bf16.msra.mxu0 %v54
    %87 = vmatprep.subr.bf16.mxu0 0
    %88 = vmatpush2.bf16.msra.mxu0 0
    %89 = vmatprep.subr.bf16.mxu0 0
    %90 = vmatpush2.bf16.msra.mxu0 0
    %91 = vmatprep.subr.bf16.mxu0 0
    %92 = vmatpush2.bf16.msra.mxu0 0
    %93 = vmatprep.subr.bf16.mxu0 0
    %94 = vmatpush2.bf16.msra.mxu0 0
    %95 = vmatprep.subr.bf16.mxu0 0
    %96 = vmatpush2.bf16.msra.mxu0 0
    %97 = vmatprep.subr.bf16.mxu0 0
    %98 = vmatpush2.bf16.msra.mxu0 0
    %99 = vmatprep.subr.bf16.mxu0 0
    %100 = vmatpush2.bf16.msra.mxu0 0
    %101 = vmatprep.subr.bf16.mxu0 0
    %102 = vmatpush2.bf16.msra.mxu0 0
    %103 = vmatprep.mubr.bf16.mxu0 0
    %104 = vmatmul.mubr.bf16.gmra.mxu0 %v60
    %v105 = vpop.f32.mrf.mxu0
    %v106 = vadd.f32 0.0, %v105
    %v107 = vpop.f32.mrf.mxu0
    %v108 = vpop.f32.mrf.mxu0
    %v109 = vadd.f32 0.0, %v108
    %v110 = vpop.f32.mrf.mxu0
    %111 = vmatprep.mubr.bf16.mxu0 0
    %112 = vmatmul.mubr.bf16.gmra.mxu0 %v63
    %v113 = vpop.f32.mrf.mxu0
    %v114 = vadd.f32 0.0, %v113
    %v115 = vpop.f32.mrf.mxu0
    %v116 = vpop.f32.mrf.mxu0
    %v117 = vadd.f32 0.0, %v116
    %v118 = vpop.f32.mrf.mxu0
    %119 = vmatprep.mubr.bf16.mxu0 0
    %120 = vmatmul.mubr.bf16.gmra.mxu0 %v66
    %v121 = vpop.f32.mrf.mxu0
    %v122 = vadd.f32 0.0, %v121
    %v123 = vpop.f32.mrf.mxu0
    %v124 = vpop.f32.mrf.mxu0
    %v125 = vadd.f32 0.0, %v124
    %v126 = vpop.f32.mrf.mxu0
    %127 = vmatprep.mubr.bf16.mxu0 0
    %128 = vmatmul.mubr.bf16.gmra.mxu0 %v69
    %v129 = vpop.f32.mrf.mxu0
    %v130 = vadd.f32 0.0, %v129
    %v131 = vpop.f32.mrf.mxu0
    %v132 = vpop.f32.mrf.mxu0
    %v133 = vadd.f32 0.0, %v132
    %v134 = vpop.f32.mrf.mxu0
    %135 = vdwg.mxu0
    %v136 = vtanh.pop %v106
    %v137 = vtanh.pop %v109
    %v138 = vtanh.pop %v114
    %v139 = vtanh.pop %v117
    %v140 = vtanh.pop %v122
    %v141 = vtanh.pop %v125
    %v142 = vtanh.pop %v130
    %v143 = vtanh.pop %v133
    %v144 = vpack.c.bf16 %v137, %v136
    %v145 = vpack.c.bf16 %v139, %v138
    %v146 = vpack.c.bf16 %v141, %v140
    %v147 = vpack.c.bf16 %v143, %v142
    %v148 = vld [vmem:[%s2] sm:$0xf]
    %v149 = vld [vmem:[%s2 + $0x4] sm:$0xf]
    %v150 = vld [vmem:[%s2 + $0x8] sm:$0xf]
    %v151 = vld [vmem:[%s2 + $0xc] sm:$0xf]
    %v156 = vunpack.c.l.b16 %v148
    %v157 = vunpack.c.l.b16 %v149
    %v158 = vunpack.c.l.b16 %v150
    %v159 = vunpack.c.l.b16 %v151
    %v160 = vpack.c.b16 %v157, %v156
    %v161 = vpack.c.b16 %v159, %v158
    %v165 = vsel %vm58, %v144, 0
    %v168 = vsel %vm58, %v145, 0
    %v171 = vsel %vm58, %v146, 0
    %v174 = vsel %vm58, %v147, 0
    %176 = vmatprep.subr.bf16.mxu0 0
    %177 = vmatpush1.bf16.msra.mxu0 0
    %178 = vmatprep.subr.bf16.mxu0 0
    %179 = vmatpush1.bf16.msra.mxu0 0
    %180 = vmatprep.subr.bf16.mxu0 0
    %181 = vmatpush1.bf16.msra.mxu0 0
    %182 = vmatprep.subr.bf16.mxu0 0
    %183 = vmatpush1.bf16.msra.mxu0 0
    %184 = vmatprep.subr.bf16.mxu0 0
    %185 = vmatpush1.bf16.msra.mxu0 0
    %186 = vmatprep.subr.bf16.mxu0 0
    %187 = vmatpush1.bf16.msra.mxu0 0
    %188 = vmatprep.subr.bf16.mxu0 0
    %189 = vmatpush1.bf16.msra.mxu0 %v161
    %190 = vmatprep.subr.bf16.mxu0 0
    %191 = vmatpush1.bf16.msra.mxu0 %v160
    %192 = vmatprep.subr.bf16.mxu0 0
    %193 = vmatpush2.bf16.msra.mxu0 0
    %194 = vmatprep.subr.bf16.mxu0 0
    %195 = vmatpush2.bf16.msra.mxu0 0
    %196 = vmatprep.subr.bf16.mxu0 0
    %197 = vmatpush2.bf16.msra.mxu0 0
    %198 = vmatprep.subr.bf16.mxu0 0
    %199 = vmatpush2.bf16.msra.mxu0 0
    %200 = vmatprep.subr.bf16.mxu0 0
    %201 = vmatpush2.bf16.msra.mxu0 0
    %202 = vmatprep.subr.bf16.mxu0 0
    %203 = vmatpush2.bf16.msra.mxu0 0
    %204 = vmatprep.subr.bf16.mxu0 0
    %205 = vmatpush2.bf16.msra.mxu0 0
    %206 = vmatprep.subr.bf16.mxu0 0
    %207 = vmatpush2.bf16.msra.mxu0 0
    %208 = vmatprep.mubr.bf16.mxu0 0
    %209 = vmatmul.mubr.bf16.gmra.mxu0 %v165
    %v210 = vpop.f32.mrf.mxu0
    %v211 = vadd.f32 0.0, %v210
    %v212 = vpop.f32.mrf.mxu0
    %v213 = vpop.f32.mrf.mxu0
    %v214 = vadd.f32 0.0, %v213
    %v215 = vpop.f32.mrf.mxu0
    %216 = vmatprep.mubr.bf16.mxu0 0
    %217 = vmatmul.mubr.bf16.gmra.mxu0 %v168
    %v218 = vpop.f32.mrf.mxu0
    %v219 = vadd.f32 0.0, %v218
    %v220 = vpop.f32.mrf.mxu0
    %v221 = vpop.f32.mrf.mxu0
    %v222 = vadd.f32 0.0, %v221
    %v223 = vpop.f32.mrf.mxu0
    %224 = vmatprep.mubr.bf16.mxu0 0
    %225 = vmatmul.mubr.bf16.gmra.mxu0 %v171
    %v226 = vpop.f32.mrf.mxu0
    %v227 = vadd.f32 0.0, %v226
    %v228 = vpop.f32.mrf.mxu0
    %v229 = vpop.f32.mrf.mxu0
    %v230 = vadd.f32 0.0, %v229
    %v231 = vpop.f32.mrf.mxu0
    %232 = vmatprep.mubr.bf16.mxu0 0
    %233 = vmatmul.mubr.bf16.gmra.mxu0 %v174
    %v234 = vpop.f32.mrf.mxu0
    %v235 = vadd.f32 0.0, %v234
    %v236 = vpop.f32.mrf.mxu0
    %v237 = vpop.f32.mrf.mxu0
    %v238 = vadd.f32 0.0, %v237
    %v239 = vpop.f32.mrf.mxu0
    %240 = vdwg.mxu0
    %vm241 = vcmask 7168
    %v242 = vsel %vm241, %v211, -inf
    %v243 = vrot.slane %v242, 4
    %v244 = vmax.f32 %v242, %v243
    %v245 = vrot.slane %v244, 2
    %v246 = vmax.f32 %v244, %v245
    %v247 = vrot.slane %v246, 1
    %v248 = vmax.f32 %v246, %v247
    %v249 = vsel %vm241, %v214, -inf
    %v250 = vrot.slane %v249, 4
    %v251 = vmax.f32 %v249, %v250
    %v252 = vrot.slane %v251, 2
    %v253 = vmax.f32 %v251, %v252
    %v254 = vrot.slane %v253, 1
    %v255 = vmax.f32 %v253, %v254
    %v256 = vsel %vm241, %v219, -inf
    %v257 = vrot.slane %v256, 4
    %v258 = vmax.f32 %v256, %v257
    %v259 = vrot.slane %v258, 2
    %v260 = vmax.f32 %v258, %v259
    %v261 = vrot.slane %v260, 1
    %v262 = vmax.f32 %v260, %v261
    %v263 = vsel %vm241, %v222, -inf
    %v264 = vrot.slane %v263, 4
    %v265 = vmax.f32 %v263, %v264
    %v266 = vrot.slane %v265, 2
    %v267 = vmax.f32 %v265, %v266
    %v268 = vrot.slane %v267, 1
    %v269 = vmax.f32 %v267, %v268
    %v270 = vsel %vm241, %v227, -inf
    %v271 = vrot.slane %v270, 4
    %v272 = vmax.f32 %v270, %v271
    %v273 = vrot.slane %v272, 2
    %v274 = vmax.f32 %v272, %v273
    %v275 = vrot.slane %v274, 1
    %v276 = vmax.f32 %v274, %v275
    %v277 = vsel %vm241, %v230, -inf
    %v278 = vrot.slane %v277, 4
    %v279 = vmax.f32 %v277, %v278
    %v280 = vrot.slane %v279, 2
    %v281 = vmax.f32 %v279, %v280
    %v282 = vrot.slane %v281, 1
    %v283 = vmax.f32 %v281, %v282
    %v284 = vsel %vm241, %v235, -inf
    %v285 = vrot.slane %v284, 4
    %v286 = vmax.f32 %v284, %v285
    %v287 = vrot.slane %v286, 2
    %v288 = vmax.f32 %v286, %v287
    %v289 = vrot.slane %v288, 1
    %v290 = vmax.f32 %v288, %v289
    %v291 = vsel %vm241, %v238, -inf
    %v292 = vrot.slane %v291, 4
    %v293 = vmax.f32 %v291, %v292
    %v294 = vrot.slane %v293, 2
    %v295 = vmax.f32 %v293, %v294
    %v296 = vrot.slane %v295, 1
    %v297 = vmax.f32 %v295, %v296
    %v298 = vsub.f32 %v211, %v248
    %v299 = vsub.f32 %v214, %v255
    %v300 = vsub.f32 %v219, %v262
    %v301 = vsub.f32 %v222, %v269
    %v302 = vsub.f32 %v227, %v276
    %v303 = vsub.f32 %v230, %v283
    %v304 = vsub.f32 %v235, %v290
    %v305 = vsub.f32 %v238, %v297
    %v306 = vmul.f32 %v298, 1.442695
    %v307 = vpow.pop %v306
    %v308 = vmul.f32 %v299, 1.442695
    %v309 = vpow.pop %v308
    %v310 = vmul.f32 %v300, 1.442695
    %v311 = vpow.pop %v310
    %v312 = vmul.f32 %v301, 1.442695
    %v313 = vpow.pop %v312
    %v314 = vmul.f32 %v302, 1.442695
    %v315 = vpow.pop %v314
    %v316 = vmul.f32 %v303, 1.442695
    %v317 = vpow.pop %v316
    %v318 = vmul.f32 %v304, 1.442695
    %v319 = vpow.pop %v318
    %v320 = vmul.f32 %v305, 1.442695
    %v321 = vpow.pop %v320
    %v322 = vsel %vm241, %v307, 0.0
    %v323 = vrot.slane %v322, 4
    %v324 = vadd.f32 %v322, %v323
    %v325 = vrot.slane %v324, 2
    %v326 = vadd.f32 %v324, %v325
    %v327 = vrot.slane %v326, 1
    %v328 = vadd.f32 %v326, %v327
    %v329 = vsel %vm241, %v309, 0.0
    %v330 = vrot.slane %v329, 4
    %v331 = vadd.f32 %v329, %v330
    %v332 = vrot.slane %v331, 2
    %v333 = vadd.f32 %v331, %v332
    %v334 = vrot.slane %v333, 1
    %v335 = vadd.f32 %v333, %v334
    %v336 = vsel %vm241, %v311, 0.0
    %v337 = vrot.slane %v336, 4
    %v338 = vadd.f32 %v336, %v337
    %v339 = vrot.slane %v338, 2
    %v340 = vadd.f32 %v338, %v339
    %v341 = vrot.slane %v340, 1
    %v342 = vadd.f32 %v340, %v341
    %v343 = vsel %vm241, %v313, 0.0
    %v344 = vrot.slane %v343, 4
    %v345 = vadd.f32 %v343, %v344
    %v346 = vrot.slane %v345, 2
    %v347 = vadd.f32 %v345, %v346
    %v348 = vrot.slane %v347, 1
    %v349 = vadd.f32 %v347, %v348
    %v350 = vsel %vm241, %v315, 0.0
    %v351 = vrot.slane %v350, 4
    %v352 = vadd.f32 %v350, %v351
    %v353 = vrot.slane %v352, 2
    %v354 = vadd.f32 %v352, %v353
    %v355 = vrot.slane %v354, 1
    %v356 = vadd.f32 %v354, %v355
    %v357 = vsel %vm241, %v317, 0.0
    %v358 = vrot.slane %v357, 4
    %v359 = vadd.f32 %v357, %v358
    %v360 = vrot.slane %v359, 2
    %v361 = vadd.f32 %v359, %v360
    %v362 = vrot.slane %v361, 1
    %v363 = vadd.f32 %v361, %v362
    %v364 = vsel %vm241, %v319, 0.0
    %v365 = vrot.slane %v364, 4
    %v366 = vadd.f32 %v364, %v365
    %v367 = vrot.slane %v366, 2
    %v368 = vadd.f32 %v366, %v367
    %v369 = vrot.slane %v368, 1
    %v370 = vadd.f32 %v368, %v369
    %v371 = vsel %vm241, %v321, 0.0
    %v372 = vrot.slane %v371, 4
    %v373 = vadd.f32 %v371, %v372
    %v374 = vrot.slane %v373, 2
    %v375 = vadd.f32 %v373, %v374
    %v376 = vrot.slane %v375, 1
    %v377 = vadd.f32 %v375, %v376
    %v378 = vrcp.pop %v328
    %v379 = vrcp.pop %v335
    %v380 = vrcp.pop %v342
    %v381 = vrcp.pop %v349
    %v382 = vrcp.pop %v356
    %v383 = vrcp.pop %v363
    %v384 = vrcp.pop %v370
    %v385 = vrcp.pop %v377
    %v386 = vmul.f32 %v307, %v378
    %v387 = vmul.f32 %v309, %v379
    %v388 = vmul.f32 %v311, %v380
    %v389 = vmul.f32 %v313, %v381
    %v390 = vmul.f32 %v315, %v382
    %v391 = vmul.f32 %v317, %v383
    %v392 = vmul.f32 %v319, %v384
    %v393 = vmul.f32 %v321, %v385
    %395 = vset.pattern.permute.xlu0 0
    %396 = vperm.xlu0 %395, %v386
    %v397 = vpop.permute.xlu0 %396
    %400 = vset.pattern.permute.xlu0 0
    %401 = vperm.xlu0 %400, %v387
    %v402 = vpop.permute.xlu0 %401
    %405 = vset.pattern.permute.xlu0 0
    %406 = vperm.xlu0 %405, %v388
    %v407 = vpop.permute.xlu0 %406
    %410 = vset.pattern.permute.xlu0 0
    %411 = vperm.xlu0 %410, %v389
    %v412 = vpop.permute.xlu0 %411
    %415 = vset.pattern.permute.xlu0 0
    %416 = vperm.xlu0 %415, %v390
    %v417 = vpop.permute.xlu0 %416
    %420 = vset.pattern.permute.xlu0 0
    %421 = vperm.xlu0 %420, %v391
    %v422 = vpop.permute.xlu0 %421
    %425 = vset.pattern.permute.xlu0 0
    %426 = vperm.xlu0 %425, %v392
    %v427 = vpop.permute.xlu0 %426
    %430 = vset.pattern.permute.xlu0 0
    %431 = vperm.xlu0 %430, %v393
    %v432 = vpop.permute.xlu0 %431
    %v434 = vmul.f32 %v30, %v397
    %v435 = vmul.f32 %v31, %v402
    %v436 = vmul.f32 %v32, %v407
    %v437 = vmul.f32 %v33, %v412
    %v438 = vmul.f32 %v34, %v417
    %v439 = vmul.f32 %v35, %v422
    %v440 = vmul.f32 %v36, %v427
    %v441 = vmul.f32 %v37, %v432
    %v442 = vsel %vm58, %v434, 0.0
    %v443 = vrot.slane %v442, 4
    %v444 = vadd.f32 %v442, %v443
    %v445 = vrot.slane %v444, 2
    %v446 = vadd.f32 %v444, %v445
    %v447 = vrot.slane %v446, 1
    %v448 = vadd.f32 %v446, %v447
    %v449 = vsel %vm58, %v435, 0.0
    %v450 = vrot.slane %v449, 4
    %v451 = vadd.f32 %v449, %v450
    %v452 = vrot.slane %v451, 2
    %v453 = vadd.f32 %v451, %v452
    %v454 = vrot.slane %v453, 1
    %v455 = vadd.f32 %v453, %v454
    %v456 = vsel %vm58, %v436, 0.0
    %v457 = vrot.slane %v456, 4
    %v458 = vadd.f32 %v456, %v457
    %v459 = vrot.slane %v458, 2
    %v460 = vadd.f32 %v458, %v459
    %v461 = vrot.slane %v460, 1
    %v462 = vadd.f32 %v460, %v461
    %v463 = vsel %vm58, %v437, 0.0
    %v464 = vrot.slane %v463, 4
    %v465 = vadd.f32 %v463, %v464
    %v466 = vrot.slane %v465, 2
    %v467 = vadd.f32 %v465, %v466
    %v468 = vrot.slane %v467, 1
    %v469 = vadd.f32 %v467, %v468
    %v470 = vsel %vm58, %v438, 0.0
    %v471 = vrot.slane %v470, 4
    %v472 = vadd.f32 %v470, %v471
    %v473 = vrot.slane %v472, 2
    %v474 = vadd.f32 %v472, %v473
    %v475 = vrot.slane %v474, 1
    %v476 = vadd.f32 %v474, %v475
    %v477 = vsel %vm58, %v439, 0.0
    %v478 = vrot.slane %v477, 4
    %v479 = vadd.f32 %v477, %v478
    %v480 = vrot.slane %v479, 2
    %v481 = vadd.f32 %v479, %v480
    %v482 = vrot.slane %v481, 1
    %v483 = vadd.f32 %v481, %v482
    %v484 = vsel %vm58, %v440, 0.0
    %v485 = vrot.slane %v484, 4
    %v486 = vadd.f32 %v484, %v485
    %v487 = vrot.slane %v486, 2
    %v488 = vadd.f32 %v486, %v487
    %v489 = vrot.slane %v488, 1
    %v490 = vadd.f32 %v488, %v489
    %v491 = vsel %vm58, %v441, 0.0
    %v492 = vrot.slane %v491, 4
    %v493 = vadd.f32 %v491, %v492
    %v494 = vrot.slane %v493, 2
    %v495 = vadd.f32 %v493, %v494
    %v496 = vrot.slane %v495, 1
    %v497 = vadd.f32 %v495, %v496
    %vm506 = vcmask 1041409
    %v507 = vsel %vm506, %v455, %v448
    %vm508 = vcmask 1042434
    %v509 = vsel %vm508, %v462, %v507
    %vm510 = vcmask 1043459
    %v511 = vsel %vm510, %v469, %v509
    %vm512 = vcmask 1044484
    %v513 = vsel %vm512, %v476, %v511
    %vm514 = vcmask 1045509
    %v515 = vsel %vm514, %v483, %v513
    %vm516 = vcmask 1046534
    %v517 = vsel %vm516, %v490, %v515
    %vm518 = vcmask 1047559
    %v519 = vsel %vm518, %v497, %v517
    %521 = vst.msk [vmem:[#allocation5] sm:$0xff] %vm58, %v519
    // Predicated region
    $region18: #{tpu_custom_call.1} parent=1 // pred_check
      _
    $region19: #{tpu_custom_call.1} parent=1 // pred_check_branch
      %523 = sbr.rel (0) target = $region21
    $region20: #{tpu_custom_call.1} parent=1 // pred_region
      %s525 = ssub.s32 128, 128
      %526 = vsyncadd [#allocation4], %s525
      %s528 = sshll.u32 [#allocation5], 4
      %s529 = int_to_ptr.vmem [resolvable:$true] %s528
      %531 = dma.vmem_to_hbm [thread:$0]  %s529, 128, %s3, [#allocation4]
    $region21: #{tpu_custom_call.1} parent=1 // pred_fallthru
      _
    // Predicated region
    $region22: #{tpu_custom_call.1} parent=1 // pred_check
      _
    $region23: #{tpu_custom_call.1} parent=1 // pred_check_branch
      %533 = sbr.rel (0) target = $region25
    $region24: #{tpu_custom_call.1} parent=1 // pred_region
      %534 = dma.done [#allocation4], 128
    $region25: #{tpu_custom_call.1} parent=1 // pred_fallthru
      _
    %535 = vsyncpa [#allocation3], 1
    %536 = vsyncpa [#allocation4], 1

</llo_original>
